<compile_context>
chip_gen: v6e
topology: v6e:2x2x1
jax: 0.10.0
libtpu: 0.0.40
codegen_flags: <defaults>
</compile_context>

<pallas_src>
import jax
import jax.numpy as jnp
import numpy as np
from jax.experimental import pallas as pl
from jax.experimental.pallas import tpu as pltpu


def _round_up(x, m):
    return (x + m - 1) // m * m


def _pick_tile(n_pad, cap, align):
    """Largest multiple of `align` that is <= cap and divides n_pad."""
    cap = max(align, min(cap, n_pad))
    t = (cap // align) * align
    while n_pad % t:
        t -= align
    return t


def _default_use_bf16_scores():
    """bf16 score chain on bf16-capable VPU/EUP chips (v6e/v7x), f32 otherwise."""
    try:
        kind = jax.devices()[0].device_kind.lower()
    except Exception:
        return False
    return ("v6" in kind) or ("v7" in kind)


# --------------------------------------------------------------------------
# Kernel 1: node projection.  One MXU pass produces Wh AND the per-node
# scores: columns f_out / f_out+1 of the padded W hold W@a1 / W@a2, so
# s1 = (x @ W_pad)[:, f_out] and s2 = (x @ W_pad)[:, f_out+1] are plain
# column reads of the f32 accumulate (taken before the bf16 downcast).
# --------------------------------------------------------------------------
def _make_project_kernel(f_out):
    def kernel(x_ref, w_ref, wh_ref, s1_ref, s2_ref):
        wh = jnp.dot(x_ref[...], w_ref[...],
                     preferred_element_type=jnp.float32)      # [TQ, F_pad] f32
        s1_ref[...] = wh[:, f_out:f_out + 1]                  # Wh @ a1
        s2_ref[...] = wh[:, f_out + 1:f_out + 2]              # Wh @ a2
        wh_ref[...] = wh.astype(jnp.bfloat16)
    return kernel


# --------------------------------------------------------------------------
# Kernel 2: tiled attention with online softmax (flash-attention style).
#   grid = (N_pad // TQ, N_pad // TK); key axis (last) is the reduction axis.
#   The output block (index depends only on qi) is the accumulator.
# --------------------------------------------------------------------------
def _make_attention_kernel(tk, wh_resident, use_bf16_scores):
    sd = jnp.bfloat16 if use_bf16_scores else jnp.float32

    def kernel(s1_ref, s2_ref, adj_ref, wh_ref, out_ref, m_sc, l_sc):
        ki = pl.program_id(1)

        @pl.when(ki == 0)
        def _init():
            m_sc[...] = jnp.full(m_sc.shape, -jnp.inf, jnp.float32)
            l_sc[...] = jnp.zeros(l_sc.shape, jnp.float32)
            out_ref[...] = jnp.zeros(out_ref.shape, jnp.float32)

        # e[i, j] = leakyrelu(s1[i] + s2[j]), slope 0.2.  The whole [TQ, TK]
        # elementwise chain runs in bf16 on v6e/v7x, f32 on v5e.
        e = s1_ref[...].astype(sd) + s2_ref[...].astype(sd)
        e = jnp.maximum(e, e * 0.2)                           # leakyrelu
        # Scatter of edge scores into zeros == masked select; non-edge zeros
        # take part in the full-row softmax (matches F.softmax(att, dim=1)).
        # Padded key columns arrive with adj=1 and s2=-inf, i.e. att=-inf ->
        # exp=0, so they drop out of the max / sum / matmul with no extra ops.
        att = jnp.where(adj_ref[...] != 0, e, 0.0)

        # Online softmax bookkeeping stays f32 (tiny [TQ, 1] tensors).
        m_prev = m_sc[...]
        tile_max = jnp.max(att, axis=1, keepdims=True).astype(jnp.float32)
        m_new = jnp.maximum(m_prev, tile_max)
        alpha = jnp.exp(m_prev - m_new)
        p = jnp.exp(att - m_new.astype(sd))                   # bf16 exp on v6e/v7x
        l_sc[...] = alpha * l_sc[...] + jnp.sum(p.astype(jnp.float32),
                                                axis=1, keepdims=True)

        if wh_resident:
            # Whole bf16 Wh lives in VMEM; slice the current key tile.
            start = pl.multiple_of(ki * tk, tk)
            wh_tile = wh_ref[pl.ds(start, tk), :]
        else:
            wh_tile = wh_ref[...]
        p_mm = p if use_bf16_scores else p.astype(jnp.bfloat16)

        # Dominant matmul (bf16 operands, f32 acc) straight into the output
        # block, which stays VMEM-resident across the key axis.
        out_ref[...] = alpha * out_ref[...] + jnp.dot(
            p_mm, wh_tile, preferred_element_type=jnp.float32)
        m_sc[...] = m_new

        # TODO(synk): F.dropout(p=0.6) on the attention matrix is stochastic
        # and training-mode only; eval-mode forward (identity) is implemented.

        @pl.when(ki == pl.num_programs(1) - 1)
        def _finalize():
            out_ref[...] = out_ref[...] * pl.reciprocal(l_sc[...], approx=True)

    return kernel


def gat_layer_forward(x, adj, W, a, heads, *, tile_q=512, tile_k=512,
                      use_bf16_scores=None):
    """Pallas implementation of GATLayer.forward (eval mode)."""
    N, f_in = x.shape
    f_out = W.shape[1]
    if use_bf16_scores is None:
        use_bf16_scores = _default_use_bf16_scores()

    # Lane-dense feature axis; two extra columns carry W@a1 / W@a2.
    f_pad = _round_up(f_out + 2, 128)

    # ---- padded size & tile selection -------------------------------------
    n_pad = _round_up(N, 128)
    # Keep >=2 row tiles whenever possible so the "parallel" row axis can use
    # both TensorCores on v7x; key tiles stay large (>=256 matches MXU depth).
    tq = _pick_tile(n_pad, min(tile_q, max(8, n_pad // 2)), 8)
    tk = _pick_tile(n_pad, tile_k, 128)

    # ---- one-time layout plumbing (plain JAX) ------------------------------
    W_pad = jnp.zeros((f_in, f_pad), jnp.float32)
    W_pad = W_pad.at[:, :f_out].set(W)
    W_pad = W_pad.at[:, f_out].set(W @ a[:f_out, 0])        # -> s1 column
    W_pad = W_pad.at[:, f_out + 1].set(W @ a[f_out:, 0])    # -> s2 column

    x_pad = x if n_pad == N else jnp.pad(x, ((0, n_pad - N), (0, 0)))
    x_bf16 = x_pad.astype(jnp.bfloat16)
    w_bf16 = W_pad.astype(jnp.bfloat16)

    # Adjacency is only a mask: ship it as int8 (4x less HBM/VMEM than f32).
    adj_mask = (adj != 0).astype(jnp.int8)
    if n_pad > N:
        adj_mask = jnp.pad(adj_mask, ((0, n_pad - N), (0, n_pad - N)))
        # Padded key columns: mark as "edges" and give them a -inf score (via
        # s2 below) so they are excluded from the full-row softmax instead of
        # wrongly adding exp(-m) terms to the denominator.  Padded query rows
        # stay all-zero; their garbage output rows are sliced off.
        adj_mask = adj_mask.at[:, N:].set(1)

    # ---- kernel 1: projection (Wh, s1, s2 in one MXU pass) -----------------
    wh, s1, s2 = pl.pallas_call(
        _make_project_kernel(f_out),
        out_shape=(
            jax.ShapeDtypeStruct((n_pad, f_pad), jnp.bfloat16),
            jax.ShapeDtypeStruct((n_pad, 1), jnp.float32),
            jax.ShapeDtypeStruct((n_pad, 1), jnp.float32),
        ),
        grid=(n_pad // tq,),
        in_specs=[
            pl.BlockSpec((tq, f_in), lambda i: (i, 0)),
            pl.BlockSpec((f_in, f_pad), lambda i: (0, 0)),
        ],
        out_specs=(
            pl.BlockSpec((tq, f_pad), lambda i: (i, 0)),
            pl.BlockSpec((tq, 1), lambda i: (i, 0)),
            pl.BlockSpec((tq, 1), lambda i: (i, 0)),
        ),
        compiler_params=pltpu.CompilerParams(
            dimension_semantics=("parallel",)),
    )(x_bf16, w_bf16)

    # s2 broadcast along the key (lane) axis -> lane-dense [1, N_pad] row;
    # padded key entries are set to -inf (see adjacency comment above).
    s2_row = s2.reshape(1, n_pad)
    if n_pad > N:
        s2_row = s2_row.at[:, N:].set(-jnp.inf)

    # ---- kernel 2: tiled attention + online softmax ------------------------
    # Hold the whole bf16 Wh VMEM-resident when it (double-buffered) fits a
    # conservative cross-generation budget: biggest win on v5e (slowest HBM),
    # still safe on v7x (64 MiB VMEM).  On v5e/v6e (128 MiB physical) this
    # budget can be raised substantially.
    wh_bytes = n_pad * f_pad * 2
    wh_resident = (2 * wh_bytes) <= 16 * 1024 * 1024
    vmem_limit = 32 * 1024 * 1024 + (2 * wh_bytes if wh_resident else 0)

    if wh_resident:
        wh_spec = pl.BlockSpec((n_pad, f_pad), lambda qi, ki: (0, 0))
    else:
        wh_spec = pl.BlockSpec((tk, f_pad), lambda qi, ki: (ki, 0))

    h_pad = pl.pallas_call(
        _make_attention_kernel(tk, wh_resident, use_bf16_scores),
        out_shape=jax.ShapeDtypeStruct((n_pad, f_pad), jnp.float32),
        grid_spec=pltpu.PrefetchScalarGridSpec(
            num_scalar_prefetch=0,
            grid=(n_pad // tq, n_pad // tk),
            in_specs=[
                pl.BlockSpec((tq, 1), lambda qi, ki: (qi, 0)),
                pl.BlockSpec((1, tk), lambda qi, ki: (0, ki)),
                pl.BlockSpec((tq, tk), lambda qi, ki: (qi, ki)),
                wh_spec,
            ],
            out_specs=pl.BlockSpec((tq, f_pad), lambda qi, ki: (qi, 0)),
            scratch_shapes=[
                pltpu.VMEM((tq, 1), jnp.float32),       # running max m
                pltpu.VMEM((tq, 1), jnp.float32),       # running sum l
            ],
        ),
        compiler_params=pltpu.CompilerParams(
            # Row tiles are independent -> "parallel" (both TCs on v7x);
            # key axis carries the softmax accumulator -> "arbitrary" (last).
            dimension_semantics=("parallel", "arbitrary"),
            vmem_limit_bytes=vmem_limit,
        ),
    )(s1, s2_row, adj_mask, wh)

    h_prime = h_pad[:N, :f_out]
    if heads > 1:
        h_prime = h_prime.reshape(N, heads, f_out // heads).mean(axis=1)
    return h_prime


def gat_layer_reference(x, adj, W, a, heads):
    """Pure-JAX f32 reference mirroring the PyTorch semantics (eval mode)."""
    N = x.shape[0]
    f_out = W.shape[1]
    Wh = x @ W
    s1 = Wh @ a[:f_out, :]               # [N, 1]
    s2 = Wh @ a[f_out:, :]               # [N, 1]
    e = s1 + s2.T
    e = jnp.where(e > 0, e, 0.2 * e)
    att = jnp.where(adj != 0.0, e, 0.0)
    att = jax.nn.softmax(att, axis=1)
    h = att @ Wh
    if heads > 1:
        h = h.reshape(N, heads, f_out // heads).mean(axis=1)
    return h


def _xavier_uniform(key, shape, gain):
    fan_out, fan_in = shape[0], shape[1]
    bound = gain * np.sqrt(6.0 / (fan_in + fan_out))
    return jax.random.uniform(key, shape, jnp.float32, -bound, bound)


if __name__ == "__main__":
    in_features = 32
    out_features = 64
    heads = 2

    key = jax.random.PRNGKey(0)
    k_x, k_adj, k_W, k_a, k_x2, k_adj2 = jax.random.split(key, 6)

    # Deterministic parameter init (xavier_uniform, gain=1.414 as in __init__).
    W = _xavier_uniform(k_W, (in_features, out_features), gain=1.414)
    a = _xavier_uniform(k_a, (2 * out_features, 1), gain=1.414)

    def make_inputs(n, kx, kadj):
        x = jax.random.normal(kx, (n, in_features), dtype=jnp.float32)
        adj = (jax.random.uniform(kadj, (n, n)) < 0.1).astype(jnp.float32)
        adj = jnp.maximum(adj, jnp.eye(n, dtype=jnp.float32))
        return x, adj

    # Test 1: tile-aligned N, f32 score path (portable to every TPU gen).
    # bf16 MXU operands + folded bf16 a-columns + approx reciprocal -> looser
    # tolerance than an all-f32 pipeline.
    x, adj = make_inputs(256, k_x, k_adj)
    out = jax.block_until_ready(
        gat_layer_forward(x, adj, W, a, heads, use_bf16_scores=False))
    ref = gat_layer_reference(x, adj, W, a, heads)
    np.testing.assert_allclose(np.asarray(out), np.asarray(ref),
                               rtol=2.5e-2, atol=2.5e-2)

    # Test 2: N not a multiple of the tile (exercises padded key columns and
    # padded query rows) with the device-default score dtype (bf16 on
    # v6e/v7x -> extra headroom in the tolerance).
    x2, adj2 = make_inputs(200, k_x2, k_adj2)
    out2 = jax.block_until_ready(gat_layer_forward(x2, adj2, W, a, heads))
    ref2 = gat_layer_reference(x2, adj2, W, a, heads)
    np.testing.assert_allclose(np.asarray(out2), np.asarray(ref2),
                               rtol=6e-2, atol=6e-2)

    print("KERNEL_OK")
</pallas_src>

<mosaic_0001>
module attributes {stable_mosaic.version = 11 : i64} {
  func.func @kernel(%arg0: i32, %arg1: memref<128x32xbf16, #tpu.memory_space<vmem>>, %arg2: memref<32x128xbf16, #tpu.memory_space<vmem>>, %arg3: memref<128x128xbf16, #tpu.memory_space<vmem>>, %arg4: memref<128x1xf32, #tpu.memory_space<vmem>>, %arg5: memref<128x1xf32, #tpu.memory_space<vmem>>) attributes {dimension_semantics = [#tpu.dimension_semantics<parallel>], iteration_bounds = array<i64: 2>, scalar_prefetch = 0 : i64, scratch_operands = 0 : i64, tpu.core_type = #tpu.core_type<tc>, window_params = [{transform_indices = @transform_0, window_bounds = array<i64: 128, 32>}, {pipeline_mode = #tpu.pipeline_mode<synchronous>, transform_indices = @transform_1, window_bounds = array<i64: 32, 128>}, {transform_indices = @transform_2, window_bounds = array<i64: 128, 128>}, {transform_indices = @transform_3, window_bounds = array<i64: 128, 1>}, {transform_indices = @transform_4, window_bounds = array<i64: 128, 1>}]} {
    %c0 = arith.constant 0 : index
    %c0_0 = arith.constant 0 : index
    %0 = vector.load %arg1[%c0, %c0_0] : memref<128x32xbf16, #tpu.memory_space<vmem>>, vector<128x32xbf16>
    %c0_1 = arith.constant 0 : index
    %c0_2 = arith.constant 0 : index
    %1 = vector.load %arg2[%c0_1, %c0_2] : memref<32x128xbf16, #tpu.memory_space<vmem>>, vector<32x128xbf16>
    %cst = arith.constant dense<0.000000e+00> : vector<128x128xf32>
    %2 = tpu.matmul %0, %1, %cst {dimension_numbers = #tpu.dot_dimension_numbers<[1], [0], [0], [1], [0, 0, 1, 1], [], []>} : vector<128x32xbf16>, vector<32x128xbf16>, vector<128x128xf32> -> vector<128x128xf32>
    %3 = vector.extract_strided_slice %2 {offsets = [0, 64], sizes = [128, 1], strides = [1, 1]} : vector<128x128xf32> to vector<128x1xf32>
    %c0_3 = arith.constant 0 : index
    %c0_4 = arith.constant 0 : index
    %4 = vector.load %arg4[%c0_3, %c0_4] : memref<128x1xf32, #tpu.memory_space<vmem>>, vector<128x1xf32>
    tpu.vector_store %arg4[%c0_3, %c0_4], %3 {strides = array<i32>} : memref<128x1xf32, #tpu.memory_space<vmem>>, vector<128x1xf32>,
    %5 = vector.extract_strided_slice %2 {offsets = [0, 65], sizes = [128, 1], strides = [1, 1]} : vector<128x128xf32> to vector<128x1xf32>
    %c0_5 = arith.constant 0 : index
    %c0_6 = arith.constant 0 : index
    %6 = vector.load %arg5[%c0_5, %c0_6] : memref<128x1xf32, #tpu.memory_space<vmem>>, vector<128x1xf32>
    tpu.vector_store %arg5[%c0_5, %c0_6], %5 {strides = array<i32>} : memref<128x1xf32, #tpu.memory_space<vmem>>, vector<128x1xf32>,
    %7 = arith.truncf %2 : vector<128x128xf32> to vector<128x128xbf16>
    %c0_7 = arith.constant 0 : index
    %c0_8 = arith.constant 0 : index
    %8 = vector.load %arg3[%c0_7, %c0_8] : memref<128x128xbf16, #tpu.memory_space<vmem>>, vector<128x128xbf16>
    tpu.vector_store %arg3[%c0_7, %c0_8], %7 {strides = array<i32>} : memref<128x128xbf16, #tpu.memory_space<vmem>>, vector<128x128xbf16>,
    return
  }
  func.func @transform_0(%arg0: i32) -> (i32, i32) {
    %c0_i32 = arith.constant 0 : i32
    %c0_i32_0 = arith.constant 0 : i32
    return %arg0, %c0_i32 : i32, i32
  }
  func.func @transform_1(%arg0: i32) -> (i32, i32) {
    %c0_i32 = arith.constant 0 : i32
    %c0_i32_0 = arith.constant 0 : i32
    %c0_i32_1 = arith.constant 0 : i32
    return %c0_i32, %c0_i32_0 : i32, i32
  }
  func.func @transform_2(%arg0: i32) -> (i32, i32) {
    %c0_i32 = arith.constant 0 : i32
    %c0_i32_0 = arith.constant 0 : i32
    return %arg0, %c0_i32 : i32, i32
  }
  func.func @transform_3(%arg0: i32) -> (i32, i32) {
    %c0_i32 = arith.constant 0 : i32
    %c0_i32_0 = arith.constant 0 : i32
    return %arg0, %c0_i32 : i32, i32
  }
  func.func @transform_4(%arg0: i32) -> (i32, i32) {
    %c0_i32 = arith.constant 0 : i32
    %c0_i32_0 = arith.constant 0 : i32
    return %arg0, %c0_i32 : i32, i32
  }
}

</mosaic_0001>

<llo_original>
// kernel: tpu_custom_call.1
$region0: #{tpu_custom_call.1}
  #allocation0 [shape = 'u32[]', space=smem, size = 0x4, offset = 0x4, fixed_abs, tag = 'smem constant byte address 0x4 - core index']
  #allocation1 [shape = 'u32[144,128]{1,0:T(1,128)}', space=vmem, size = 0x12000, scoped, tag = 'internal scratch']
  %s0 = inlined_call_operand.vmem [shape: bf16[256,32], index: 0, kind: input, shape index: {}]
  %s1 = inlined_call_operand.vmem [shape: bf16[32,128], index: 1, kind: input, shape index: {}]
  %s2 = inlined_call_operand.hbm [shape: bf16[256,128], index: 2, kind: output, shape index: {0}]
  %s3 = inlined_call_operand.vmem [shape: f32[256,1], index: 3, kind: output, shape index: {1}]
  %s4 = inlined_call_operand.vmem [shape: f32[256,1], index: 4, kind: output, shape index: {2}]
  %5 = xla_tuple %s2, %s3, %s4
  %s6 = sld [smem:[#allocation0]]
  $region57: #{tpu_custom_call.1} parent=0
    _
  %s8 = ssub.s32 1, %s6
  %s9 = scalar_select 0, %s8, %s6
  $region1: #{tpu_custom_call.1} parent=0
    #allocation2 [shape = 'u8[65536]{0}', space=vmem, size = 0x10000, scoped, tag = 'output window, operand 0']
    #allocation3 [shape = 's32[2]{0}', space=sflag, size = 0x8, scoped, tag = 'scoped memory for tpu_custom_call.1']
    %10 = vsyncpa [#allocation3], 0
    %s11 = scalar_lea.sflag [#allocation3], 1
    %12 = vsyncpa %s11, 0
    loop: start=0, step=1, limit=4
    $region2: #{tpu_custom_call.1} parent=1 // loop_pre_header
      _
    $region3: #{tpu_custom_call.1} parent=1 // loop_header
      %s14 = sphi 0, %s18
      %p15 = scmp.ge.s32.totalorder %s14, 4
      %s24 = sphi 0, %s26
      %s27 = sphi 0, %s24
      %s28 = sphi 0, %s27
      %s44 = sphi 0, %s28
      %s48 = sphi 0, %s48
      %s50 = sphi 0, %s48
      %s51 = sphi 0, %s50
      %s65 = sphi 0, %s51
      %s71 = sphi 0, %s73
      %s74 = sphi 0, %s71
      %s75 = sphi 0, %s74
      %s91 = sphi 0, %s75
      %s97 = sphi 0, %s99
      %s100 = sphi 0, %s97
      %s101 = sphi 0, %s100
      %s117 = sphi 0, %s101
      %s123 = sphi 0, %s125
      %s126 = sphi 0, %s123
      %s127 = sphi 0, %s126
      %s143 = sphi 0, %s127
    $region4: #{tpu_custom_call.1} parent=1 // loop_header_branch
      %17 = sbr.rel (%p15) target = $region8
    $region5: #{tpu_custom_call.1} parent=1 // loop_body
      %s19 = ssub.s32 %s14, 1
      %s20 = ssub.s32 %s14, 2
      %s21 = sadd.s32 %s14, 1
      %s22 = ssub.s32 %s14, %s21
      %p23 = scmp.eq.s32.totalorder %s22, 0
      %s25 = sadd.s32 %s24, 1
      %s26 = scalar_select %p23, %s24, %s25
      %p29 = pneg %p23
      %p30 = scmp.eq.s32.totalorder %s14, 1
      %p31 = por %p29, %p30
      %p32 = scmp.ne.s32.totalorder %s24, %s27
      %p33 = scmp.eq.s32.totalorder %s14, 0
      %p34 = por %p32, %p33
      %p35 = scmp.ne.s32.totalorder %s24, %s27
      %p36 = scmp.eq.s32.totalorder %s19, 1
      %p37 = por %p35, %p36
      %p38 = scmp.ne.s32.totalorder %s27, %s28
      %p39 = scmp.eq.s32.totalorder %s19, 0
      %p40 = por %p38, %p39
      %p41 = scmp.ne.s32.totalorder %s27, %s28
      %p42 = scmp.eq.s32.totalorder %s20, 1
      %p43 = por %p41, %p42
      %p45 = scmp.ne.s32.totalorder %s28, %s44
      %p46 = scmp.eq.s32.totalorder %s20, 0
      %p47 = por %p45, %p46
      %s49 = sadd.s32 %s48, 1
      %p52 = scmp.eq.s32.totalorder %s14, 1
      %p53 = scmp.ne.s32.totalorder %s48, %s50
      %p54 = scmp.eq.s32.totalorder %s14, 0
      %p55 = por %p53, %p54
      %p56 = scmp.ne.s32.totalorder %s48, %s50
      %p57 = scmp.eq.s32.totalorder %s19, 1
      %p58 = por %p56, %p57
      %p59 = scmp.ne.s32.totalorder %s50, %s51
      %p60 = scmp.eq.s32.totalorder %s19, 0
      %p61 = por %p59, %p60
      %p62 = scmp.ne.s32.totalorder %s50, %s51
      %p63 = scmp.eq.s32.totalorder %s20, 1
      %p64 = por %p62, %p63
      %p66 = scmp.ne.s32.totalorder %s51, %s65
      %p67 = scmp.eq.s32.totalorder %s20, 0
      %p68 = por %p66, %p67
      %s69 = ssub.s32 %s14, %s21
      %p70 = scmp.eq.s32.totalorder %s69, 0
      %s72 = sadd.s32 %s71, 1
      %s73 = scalar_select %p70, %s71, %s72
      %p76 = pneg %p70
      %p77 = scmp.eq.s32.totalorder %s14, 1
      %p78 = por %p76, %p77
      %p79 = scmp.ne.s32.totalorder %s71, %s74
      %p80 = scmp.eq.s32.totalorder %s14, 0
      %p81 = por %p79, %p80
      %p82 = scmp.ne.s32.totalorder %s71, %s74
      %p83 = scmp.eq.s32.totalorder %s19, 1
      %p84 = por %p82, %p83
      %p85 = scmp.ne.s32.totalorder %s74, %s75
      %p86 = scmp.eq.s32.totalorder %s19, 0
      %p87 = por %p85, %p86
      %p88 = scmp.ne.s32.totalorder %s74, %s75
      %p89 = scmp.eq.s32.totalorder %s20, 1
      %p90 = por %p88, %p89
      %p92 = scmp.ne.s32.totalorder %s75, %s91
      %p93 = scmp.eq.s32.totalorder %s20, 0
      %p94 = por %p92, %p93
      %s95 = ssub.s32 %s14, %s21
      %p96 = scmp.eq.s32.totalorder %s95, 0
      %s98 = sadd.s32 %s97, 1
      %s99 = scalar_select %p96, %s97, %s98
      %p102 = pneg %p96
      %p103 = scmp.eq.s32.totalorder %s14, 1
      %p104 = por %p102, %p103
      %p105 = scmp.ne.s32.totalorder %s97, %s100
      %p106 = scmp.eq.s32.totalorder %s14, 0
      %p107 = por %p105, %p106
      %p108 = scmp.ne.s32.totalorder %s97, %s100
      %p109 = scmp.eq.s32.totalorder %s19, 1
      %p110 = por %p108, %p109
      %p111 = scmp.ne.s32.totalorder %s100, %s101
      %p112 = scmp.eq.s32.totalorder %s19, 0
      %p113 = por %p111, %p112
      %p114 = scmp.ne.s32.totalorder %s100, %s101
      %p115 = scmp.eq.s32.totalorder %s20, 1
      %p116 = por %p114, %p115
      %p118 = scmp.ne.s32.totalorder %s101, %s117
      %p119 = scmp.eq.s32.totalorder %s20, 0
      %p120 = por %p118, %p119
      %s121 = ssub.s32 %s14, %s21
      %p122 = scmp.eq.s32.totalorder %s121, 0
      %s124 = sadd.s32 %s123, 1
      %s125 = scalar_select %p122, %s123, %s124
      %p128 = pneg %p122
      %p129 = scmp.eq.s32.totalorder %s14, 1
      %p130 = por %p128, %p129
      %p131 = scmp.ne.s32.totalorder %s123, %s126
      %p132 = scmp.eq.s32.totalorder %s14, 0
      %p133 = por %p131, %p132
      %p134 = scmp.ne.s32.totalorder %s123, %s126
      %p135 = scmp.eq.s32.totalorder %s19, 1
      %p136 = por %p134, %p135
      %p137 = scmp.ne.s32.totalorder %s126, %s127
      %p138 = scmp.eq.s32.totalorder %s19, 0
      %p139 = por %p137, %p138
      %p140 = scmp.ne.s32.totalorder %s126, %s127
      %p141 = scmp.eq.s32.totalorder %s20, 1
      %p142 = por %p140, %p141
      %p144 = scmp.ne.s32.totalorder %s127, %s143
      %p145 = scmp.eq.s32.totalorder %s20, 0
      %p146 = por %p144, %p145
      %p147 = scmp.le.s32.totalorder 1, %s14
      %p148 = scmp.lt.s32.totalorder %s14, 3
      %p149 = pnand %p147, %p148
      %p150 = pneg %p149
      // Predicated region
      $region9: #{tpu_custom_call.1} parent=5 // pred_check
        _
      $region10: #{tpu_custom_call.1} parent=5 // pred_check_branch
        %152 = sbr.rel (%p149) target = $region12
      $region11: #{tpu_custom_call.1} parent=5 // pred_region
        %s153 = ssub.s32 %s14, 1
        // Predicated region
        $region13: #{tpu_custom_call.1} parent=11 // pred_check
          %p154 = pneg %p61
        $region14: #{tpu_custom_call.1} parent=11 // pred_check_branch
          %156 = sbr.rel (%p154) target = $region16
        $region15: #{tpu_custom_call.1} parent=11 // pred_region
          _
        $region16: #{tpu_custom_call.1} parent=11 // pred_fallthru
          _
      $region12: #{tpu_custom_call.1} parent=5 // pred_fallthru
        _
      %p157 = scmp.lt.s32.totalorder %s14, 2
      // Predicated region
      $region17: #{tpu_custom_call.1} parent=5 // pred_check
        %p158 = pneg %p157
      $region18: #{tpu_custom_call.1} parent=5 // pred_check_branch
        %160 = sbr.rel (%p158) target = $region20
      $region19: #{tpu_custom_call.1} parent=5 // pred_region
        // Predicated region
        $region21: #{tpu_custom_call.1} parent=19 // pred_check
          %p161 = pneg %p34
        $region22: #{tpu_custom_call.1} parent=19 // pred_check_branch
          %163 = sbr.rel (%p161) target = $region24
        $region23: #{tpu_custom_call.1} parent=19 // pred_region
          %s164 = smul.u32 16, %s14
          %p165 = scmp.lt.s32.totalorder %s164, 31
          %s166 = scalar_select %p165, %s164, 31
          %s167 = smul.addr %s166, 4
          %s168 = scalar_lea.vmem %s0, %s167
          %s169 = smul.u32 16, %s14
        $region24: #{tpu_custom_call.1} parent=19 // pred_fallthru
          _
      $region20: #{tpu_custom_call.1} parent=5 // pred_fallthru
        _
      %p170 = scmp.le.s32.totalorder 1, %s14
      %p171 = scmp.lt.s32.totalorder %s14, 3
      %p172 = pnand %p170, %p171
      %p173 = pneg %p172
      // Predicated region
      $region25: #{tpu_custom_call.1} parent=5 // pred_check
        _
      $region26: #{tpu_custom_call.1} parent=5 // pred_check_branch
        %175 = sbr.rel (%p172) target = $region28
      $region27: #{tpu_custom_call.1} parent=5 // pred_region
        %s176 = ssub.s32 %s14, 1
        %s177 = smul.u32 16, %s19
        %p178 = scmp.lt.s32.totalorder %s177, 31
        %s179 = scalar_select %p178, %s177, 31
        %s180 = smul.addr %s179, 4
        %s181 = scalar_lea.vmem %s0, %s180
        %p182 = pneg %p40
        %p183 = pneg %p37
        %p184 = pneg %p61
        %p185 = pneg %p58
        %p186 = pneg %p87
        %p187 = pneg %p84
        %s188 = sand.u32 %s74, 1
        %s189 = scalar_lea.sflag [#allocation3], %s188
        %s190 = sand.u32 %s74, 1
        %s191 = smul.addr %s190, 64
        %s192 = scalar_lea.vmem [#allocation2], %s191
        %p193 = pneg %p113
        %p194 = pneg %p110
        %s195 = smul.u32 16, %s19
        %p196 = scmp.lt.s32.totalorder %s195, 31
        %s197 = scalar_select %p196, %s195, 31
        %s198 = smul.addr %s197, 8
        %s199 = scalar_lea.vmem %s3, %s198
        %p200 = pneg %p139
        %p201 = pneg %p136
        %s202 = smul.u32 16, %s19
        %p203 = scmp.lt.s32.totalorder %s202, 31
        %s204 = scalar_select %p203, %s202, 31
        %s205 = smul.addr %s204, 8
        %s206 = scalar_lea.vmem %s4, %s205
        %s207 = smul.u32 16, %s19
        %p208 = scmp.lt.s32.totalorder %s207, 31
        %s209 = scalar_select %p208, %s207, 31
        %s210 = smul.addr %s209, 4
        %s211 = scalar_lea.vmem %s0, %s210
        %s212 = smul.u32 16, %s19
        %s213 = smul.u32 16, %s19
        %s214 = smul.u32 16, %s19
        %p215 = scmp.lt.s32.totalorder %s214, 31
        %s216 = scalar_select %p215, %s214, 31
        %s217 = smul.addr %s216, 8
        %s218 = scalar_lea.vmem %s3, %s217
        %s219 = smul.u32 16, %s19
        %s220 = smul.u32 16, %s19
        %p221 = scmp.lt.s32.totalorder %s220, 31
        %s222 = scalar_select %p221, %s220, 31
        %s223 = smul.addr %s222, 8
        %s224 = scalar_lea.vmem %s4, %s223
        %s225 = smul.u32 16, %s19
        %v227 = vld [vmem:[%s211] sm:$0xf]
        %v228 = vld [vmem:[%s211 + $0x4] sm:$0xf]
        %v229 = vld [vmem:[%s211 + $0x8] sm:$0xf]
        %v230 = vld [vmem:[%s211 + $0xc] sm:$0xf]
        %v231 = vld [vmem:[%s211 + $0x10] sm:$0xf]
        %v232 = vld [vmem:[%s211 + $0x14] sm:$0xf]
        %v233 = vld [vmem:[%s211 + $0x18] sm:$0xf]
        %v234 = vld [vmem:[%s211 + $0x1c] sm:$0xf]
        %v235 = vld [vmem:[%s211 + $0x20] sm:$0xf]
        %v236 = vld [vmem:[%s211 + $0x24] sm:$0xf]
        %v237 = vld [vmem:[%s211 + $0x28] sm:$0xf]
        %v238 = vld [vmem:[%s211 + $0x2c] sm:$0xf]
        %v239 = vld [vmem:[%s211 + $0x30] sm:$0xf]
        %v240 = vld [vmem:[%s211 + $0x34] sm:$0xf]
        %v241 = vld [vmem:[%s211 + $0x38] sm:$0xf]
        %v242 = vld [vmem:[%s211 + $0x3c] sm:$0xf]
        %v243 = vld [vmem:[%s1] sm:$0xf]
        %v244 = vld [vmem:[%s1 + $0x4] sm:$0xf]
        %v245 = vld [vmem:[%s1 + $0x8] sm:$0xf]
        %v246 = vld [vmem:[%s1 + $0xc] sm:$0xf]
        %v263 = vunpack.c.l.b16 %v227
        %v264 = vunpack.c.l.b16 %v228
        %v265 = vunpack.c.l.b16 %v229
        %v266 = vunpack.c.l.b16 %v230
        %v267 = vunpack.c.l.b16 %v231
        %v268 = vunpack.c.l.b16 %v232
        %v269 = vunpack.c.l.b16 %v233
        %v270 = vunpack.c.l.b16 %v234
        %v271 = vunpack.c.l.b16 %v235
        %v272 = vunpack.c.l.b16 %v236
        %v273 = vunpack.c.l.b16 %v237
        %v274 = vunpack.c.l.b16 %v238
        %v275 = vunpack.c.l.b16 %v239
        %v276 = vunpack.c.l.b16 %v240
        %v277 = vunpack.c.l.b16 %v241
        %v278 = vunpack.c.l.b16 %v242
        %v279 = vpack.c.b16 %v264, %v263
        %v280 = vpack.c.b16 %v266, %v265
        %v281 = vpack.c.b16 %v268, %v267
        %v282 = vpack.c.b16 %v270, %v269
        %v283 = vpack.c.b16 %v272, %v271
        %v284 = vpack.c.b16 %v274, %v273
        %v285 = vpack.c.b16 %v276, %v275
        %v286 = vpack.c.b16 %v278, %v277
        %v291 = vunpack.c.l.b16 %v243
        %v292 = vunpack.c.l.b16 %v244
        %v293 = vunpack.c.l.b16 %v245
        %v294 = vunpack.c.l.b16 %v246
        %v295 = vpack.c.b16 %v292, %v291
        %v296 = vpack.c.b16 %v294, %v293
        %vm299 = vcmask 261120
        %v301 = vsel %vm299, %v279, 0
        %v304 = vsel %vm299, %v280, 0
        %v307 = vsel %vm299, %v281, 0
        %v310 = vsel %vm299, %v282, 0
        %v313 = vsel %vm299, %v283, 0
        %v316 = vsel %vm299, %v284, 0
        %v319 = vsel %vm299, %v285, 0
        %v322 = vsel %vm299, %v286, 0
        %324 = vmatprep.subr.bf16.mxu0 0
        %325 = vmatpush1.bf16.msra.mxu0 0
        %326 = vmatprep.subr.bf16.mxu0 0
        %327 = vmatpush1.bf16.msra.mxu0 0
        %328 = vmatprep.subr.bf16.mxu0 0
        %329 = vmatpush1.bf16.msra.mxu0 0
        %330 = vmatprep.subr.bf16.mxu0 0
        %331 = vmatpush1.bf16.msra.mxu0 0
        %332 = vmatprep.subr.bf16.mxu0 0
        %333 = vmatpush1.bf16.msra.mxu0 0
        %334 = vmatprep.subr.bf16.mxu0 0
        %335 = vmatpush1.bf16.msra.mxu0 0
        %336 = vmatprep.subr.bf16.mxu0 0
        %337 = vmatpush1.bf16.msra.mxu0 %v296
        %338 = vmatprep.subr.bf16.mxu0 0
        %339 = vmatpush1.bf16.msra.mxu0 %v295
        %340 = vmatprep.subr.bf16.mxu0 0
        %341 = vmatpush2.bf16.msra.mxu0 0
        %342 = vmatprep.subr.bf16.mxu0 0
        %343 = vmatpush2.bf16.msra.mxu0 0
        %344 = vmatprep.subr.bf16.mxu0 0
        %345 = vmatpush2.bf16.msra.mxu0 0
        %346 = vmatprep.subr.bf16.mxu0 0
        %347 = vmatpush2.bf16.msra.mxu0 0
        %348 = vmatprep.subr.bf16.mxu0 0
        %349 = vmatpush2.bf16.msra.mxu0 0
        %350 = vmatprep.subr.bf16.mxu0 0
        %351 = vmatpush2.bf16.msra.mxu0 0
        %352 = vmatprep.subr.bf16.mxu0 0
        %353 = vmatpush2.bf16.msra.mxu0 0
        %354 = vmatprep.subr.bf16.mxu0 0
        %355 = vmatpush2.bf16.msra.mxu0 0
        %356 = vmatprep.mubr.bf16.mxu0 0
        %357 = vmatmul.mubr.bf16.gmra.mxu0 %v301
        %v358 = vpop.f32.mrf.mxu0
        %v359 = vadd.f32 0.0, %v358
        %v360 = vpop.f32.mrf.mxu0
        %v361 = vpop.f32.mrf.mxu0
        %v362 = vadd.f32 0.0, %v361
        %v363 = vpop.f32.mrf.mxu0
        %364 = vmatprep.mubr.bf16.mxu0 0
        %365 = vmatmul.mubr.bf16.gmra.mxu0 %v304
        %v366 = vpop.f32.mrf.mxu0
        %v367 = vadd.f32 0.0, %v366
        %v368 = vpop.f32.mrf.mxu0
        %v369 = vpop.f32.mrf.mxu0
        %v370 = vadd.f32 0.0, %v369
        %v371 = vpop.f32.mrf.mxu0
        %372 = vmatprep.mubr.bf16.mxu0 0
        %373 = vmatmul.mubr.bf16.gmra.mxu0 %v307
        %v374 = vpop.f32.mrf.mxu0
        %v375 = vadd.f32 0.0, %v374
        %v376 = vpop.f32.mrf.mxu0
        %v377 = vpop.f32.mrf.mxu0
        %v378 = vadd.f32 0.0, %v377
        %v379 = vpop.f32.mrf.mxu0
        %380 = vmatprep.mubr.bf16.mxu0 0
        %381 = vmatmul.mubr.bf16.gmra.mxu0 %v310
        %v382 = vpop.f32.mrf.mxu0
        %v383 = vadd.f32 0.0, %v382
        %v384 = vpop.f32.mrf.mxu0
        %v385 = vpop.f32.mrf.mxu0
        %v386 = vadd.f32 0.0, %v385
        %v387 = vpop.f32.mrf.mxu0
        %388 = vmatprep.mubr.bf16.mxu0 0
        %389 = vmatmul.mubr.bf16.gmra.mxu0 %v313
        %v390 = vpop.f32.mrf.mxu0
        %v391 = vadd.f32 0.0, %v390
        %v392 = vpop.f32.mrf.mxu0
        %v393 = vpop.f32.mrf.mxu0
        %v394 = vadd.f32 0.0, %v393
        %v395 = vpop.f32.mrf.mxu0
        %396 = vmatprep.mubr.bf16.mxu0 0
        %397 = vmatmul.mubr.bf16.gmra.mxu0 %v316
        %v398 = vpop.f32.mrf.mxu0
        %v399 = vadd.f32 0.0, %v398
        %v400 = vpop.f32.mrf.mxu0
        %v401 = vpop.f32.mrf.mxu0
        %v402 = vadd.f32 0.0, %v401
        %v403 = vpop.f32.mrf.mxu0
        %404 = vmatprep.mubr.bf16.mxu0 0
        %405 = vmatmul.mubr.bf16.gmra.mxu0 %v319
        %v406 = vpop.f32.mrf.mxu0
        %v407 = vadd.f32 0.0, %v406
        %v408 = vpop.f32.mrf.mxu0
        %v409 = vpop.f32.mrf.mxu0
        %v410 = vadd.f32 0.0, %v409
        %v411 = vpop.f32.mrf.mxu0
        %412 = vmatprep.mubr.bf16.mxu0 0
        %413 = vmatmul.mubr.bf16.gmra.mxu0 %v322
        %v414 = vpop.f32.mrf.mxu0
        %v415 = vadd.f32 0.0, %v414
        %v416 = vpop.f32.mrf.mxu0
        %v417 = vpop.f32.mrf.mxu0
        %v418 = vadd.f32 0.0, %v417
        %v419 = vpop.f32.mrf.mxu0
        %420 = vdwg.mxu0
        %437 = vrot.lane.b32.xlu0 %v359, 64
        %v438 = vpop.permute.xlu0 %437
        %439 = vrot.lane.b32.xlu0 %v362, 64
        %v440 = vpop.permute.xlu0 %439
        %441 = vrot.lane.b32.xlu0 %v367, 64
        %v442 = vpop.permute.xlu0 %441
        %443 = vrot.lane.b32.xlu0 %v370, 64
        %v444 = vpop.permute.xlu0 %443
        %445 = vrot.lane.b32.xlu0 %v375, 64
        %v446 = vpop.permute.xlu0 %445
        %447 = vrot.lane.b32.xlu0 %v378, 64
        %v448 = vpop.permute.xlu0 %447
        %449 = vrot.lane.b32.xlu0 %v383, 64
        %v450 = vpop.permute.xlu0 %449
        %451 = vrot.lane.b32.xlu0 %v386, 64
        %v452 = vpop.permute.xlu0 %451
        %453 = vrot.lane.b32.xlu0 %v391, 64
        %v454 = vpop.permute.xlu0 %453
        %455 = vrot.lane.b32.xlu0 %v394, 64
        %v456 = vpop.permute.xlu0 %455
        %457 = vrot.lane.b32.xlu0 %v399, 64
        %v458 = vpop.permute.xlu0 %457
        %459 = vrot.lane.b32.xlu0 %v402, 64
        %v460 = vpop.permute.xlu0 %459
        %461 = vrot.lane.b32.xlu0 %v407, 64
        %v462 = vpop.permute.xlu0 %461
        %463 = vrot.lane.b32.xlu0 %v410, 64
        %v464 = vpop.permute.xlu0 %463
        %465 = vrot.lane.b32.xlu0 %v415, 64
        %v466 = vpop.permute.xlu0 %465
        %467 = vrot.lane.b32.xlu0 %v418, 64
        %v468 = vpop.permute.xlu0 %467
        %vm485 = vcmask 7168
        %486 = vst.msk [vmem:[%s218] sm:$0xff] %vm485, %v438
        %487 = vst.msk [vmem:[%s218 + $0x8] sm:$0xff] %vm485, %v440
        %488 = vst.msk [vmem:[%s218 + $0x10] sm:$0xff] %vm485, %v442
        %489 = vst.msk [vmem:[%s218 + $0x18] sm:$0xff] %vm485, %v444
        %490 = vst.msk [vmem:[%s218 + $0x20] sm:$0xff] %vm485, %v446
        %491 = vst.msk [vmem:[%s218 + $0x28] sm:$0xff] %vm485, %v448
        %492 = vst.msk [vmem:[%s218 + $0x30] sm:$0xff] %vm485, %v450
        %493 = vst.msk [vmem:[%s218 + $0x38] sm:$0xff] %vm485, %v452
        %494 = vst.msk [vmem:[%s218 + $0x40] sm:$0xff] %vm485, %v454
        %495 = vst.msk [vmem:[%s218 + $0x48] sm:$0xff] %vm485, %v456
        %496 = vst.msk [vmem:[%s218 + $0x50] sm:$0xff] %vm485, %v458
        %497 = vst.msk [vmem:[%s218 + $0x58] sm:$0xff] %vm485, %v460
        %498 = vst.msk [vmem:[%s218 + $0x60] sm:$0xff] %vm485, %v462
        %499 = vst.msk [vmem:[%s218 + $0x68] sm:$0xff] %vm485, %v464
        %500 = vst.msk [vmem:[%s218 + $0x70] sm:$0xff] %vm485, %v466
        %501 = vst.msk [vmem:[%s218 + $0x78] sm:$0xff] %vm485, %v468
        %502 = vrot.lane.b32.xlu0 %v359, 63
        %v503 = vpop.permute.xlu0 %502
        %504 = vrot.lane.b32.xlu0 %v362, 63
        %v505 = vpop.permute.xlu0 %504
        %506 = vrot.lane.b32.xlu0 %v367, 63
        %v507 = vpop.permute.xlu0 %506
        %508 = vrot.lane.b32.xlu0 %v370, 63
        %v509 = vpop.permute.xlu0 %508
        %510 = vrot.lane.b32.xlu0 %v375, 63
        %v511 = vpop.permute.xlu0 %510
        %512 = vrot.lane.b32.xlu0 %v378, 63
        %v513 = vpop.permute.xlu0 %512
        %514 = vrot.lane.b32.xlu0 %v383, 63
        %v515 = vpop.permute.xlu0 %514
        %516 = vrot.lane.b32.xlu0 %v386, 63
        %v517 = vpop.permute.xlu0 %516
        %518 = vrot.lane.b32.xlu0 %v391, 63
        %v519 = vpop.permute.xlu0 %518
        %520 = vrot.lane.b32.xlu0 %v394, 63
        %v521 = vpop.permute.xlu0 %520
        %522 = vrot.lane.b32.xlu0 %v399, 63
        %v523 = vpop.permute.xlu0 %522
        %524 = vrot.lane.b32.xlu0 %v402, 63
        %v525 = vpop.permute.xlu0 %524
        %526 = vrot.lane.b32.xlu0 %v407, 63
        %v527 = vpop.permute.xlu0 %526
        %528 = vrot.lane.b32.xlu0 %v410, 63
        %v529 = vpop.permute.xlu0 %528
        %530 = vrot.lane.b32.xlu0 %v415, 63
        %v531 = vpop.permute.xlu0 %530
        %532 = vrot.lane.b32.xlu0 %v418, 63
        %v533 = vpop.permute.xlu0 %532
        %550 = vst.msk [vmem:[%s224] sm:$0xff] %vm485, %v503
        %551 = vst.msk [vmem:[%s224 + $0x8] sm:$0xff] %vm485, %v505
        %552 = vst.msk [vmem:[%s224 + $0x10] sm:$0xff] %vm485, %v507
        %553 = vst.msk [vmem:[%s224 + $0x18] sm:$0xff] %vm485, %v509
        %554 = vst.msk [vmem:[%s224 + $0x20] sm:$0xff] %vm485, %v511
        %555 = vst.msk [vmem:[%s224 + $0x28] sm:$0xff] %vm485, %v513
        %556 = vst.msk [vmem:[%s224 + $0x30] sm:$0xff] %vm485, %v515
        %557 = vst.msk [vmem:[%s224 + $0x38] sm:$0xff] %vm485, %v517
        %558 = vst.msk [vmem:[%s224 + $0x40] sm:$0xff] %vm485, %v519
        %559 = vst.msk [vmem:[%s224 + $0x48] sm:$0xff] %vm485, %v521
        %560 = vst.msk [vmem:[%s224 + $0x50] sm:$0xff] %vm485, %v523
        %561 = vst.msk [vmem:[%s224 + $0x58] sm:$0xff] %vm485, %v525
        %562 = vst.msk [vmem:[%s224 + $0x60] sm:$0xff] %vm485, %v527
        %563 = vst.msk [vmem:[%s224 + $0x68] sm:$0xff] %vm485, %v529
        %564 = vst.msk [vmem:[%s224 + $0x70] sm:$0xff] %vm485, %v531
        %565 = vst.msk [vmem:[%s224 + $0x78] sm:$0xff] %vm485, %v533
        %v566 = vpack.c.bf16 %v362, %v359
        %v567 = vpack.c.bf16 %v370, %v367
        %v568 = vpack.c.bf16 %v378, %v375
        %v569 = vpack.c.bf16 %v386, %v383
        %v570 = vpack.c.bf16 %v394, %v391
        %v571 = vpack.c.bf16 %v402, %v399
        %v572 = vpack.c.bf16 %v410, %v407
        %v573 = vpack.c.bf16 %v418, %v415
        %v582 = vunpack.c.l.b16 %v566
        %v583 = vunpack.c.h.b16 %v566
        %v584 = vunpack.c.l.b16 %v567
        %v585 = vunpack.c.h.b16 %v567
        %v586 = vunpack.c.l.b16 %v568
        %v587 = vunpack.c.h.b16 %v568
        %v588 = vunpack.c.l.b16 %v569
        %v589 = vunpack.c.h.b16 %v569
        %v590 = vunpack.c.l.b16 %v570
        %v591 = vunpack.c.h.b16 %v570
        %v592 = vunpack.c.l.b16 %v571
        %v593 = vunpack.c.h.b16 %v571
        %v594 = vunpack.c.l.b16 %v572
        %v595 = vunpack.c.h.b16 %v572
        %v596 = vunpack.c.l.b16 %v573
        %v597 = vunpack.c.h.b16 %v573
        %v598 = vpack.c.b16 %v582, %v582
        %v599 = vpack.c.b16 %v583, %v583
        %v600 = vpack.c.b16 %v584, %v584
        %v601 = vpack.c.b16 %v585, %v585
        %v602 = vpack.c.b16 %v586, %v586
        %v603 = vpack.c.b16 %v587, %v587
        %v604 = vpack.c.b16 %v588, %v588
        %v605 = vpack.c.b16 %v589, %v589
        %v606 = vpack.c.b16 %v590, %v590
        %v607 = vpack.c.b16 %v591, %v591
        %v608 = vpack.c.b16 %v592, %v592
        %v609 = vpack.c.b16 %v593, %v593
        %v610 = vpack.c.b16 %v594, %v594
        %v611 = vpack.c.b16 %v595, %v595
        %v612 = vpack.c.b16 %v596, %v596
        %v613 = vpack.c.b16 %v597, %v597
        %630 = vst [vmem:[%s192] sm:$0xf] %v598
        %631 = vst [vmem:[%s192 + $0x4] sm:$0xf] %v599
        %632 = vst [vmem:[%s192 + $0x8] sm:$0xf] %v600
        %633 = vst [vmem:[%s192 + $0xc] sm:$0xf] %v601
        %634 = vst [vmem:[%s192 + $0x10] sm:$0xf] %v602
        %635 = vst [vmem:[%s192 + $0x14] sm:$0xf] %v603
        %636 = vst [vmem:[%s192 + $0x18] sm:$0xf] %v604
        %637 = vst [vmem:[%s192 + $0x1c] sm:$0xf] %v605
        %638 = vst [vmem:[%s192 + $0x20] sm:$0xf] %v606
        %639 = vst [vmem:[%s192 + $0x24] sm:$0xf] %v607
        %640 = vst [vmem:[%s192 + $0x28] sm:$0xf] %v608
        %641 = vst [vmem:[%s192 + $0x2c] sm:$0xf] %v609
        %642 = vst [vmem:[%s192 + $0x30] sm:$0xf] %v610
        %643 = vst [vmem:[%s192 + $0x34] sm:$0xf] %v611
        %644 = vst [vmem:[%s192 + $0x38] sm:$0xf] %v612
        %645 = vst [vmem:[%s192 + $0x3c] sm:$0xf] %v613
        %s646 = sand.u32 %s74, 1
        %s647 = scalar_lea.sflag [#allocation3], %s646
        %s648 = sand.u32 %s74, 1
        %s649 = smul.addr %s648, 64
        %s650 = scalar_lea.vmem [#allocation2], %s649
        %s651 = smul.u32 16, %s19
        %p652 = scmp.lt.s32.totalorder %s651, 31
        %s653 = scalar_select %p652, %s651, 31
        %s654 = smul.addr %s653, 8
        %s655 = scalar_lea.vmem %s3, %s654
        %s656 = smul.u32 16, %s19
        %p657 = scmp.lt.s32.totalorder %s656, 31
        %s658 = scalar_select %p657, %s656, 31
        %s659 = smul.addr %s658, 8
        %s660 = scalar_lea.vmem %s4, %s659
        // Predicated region
        $region29: #{tpu_custom_call.1} parent=27 // pred_check
          %p661 = pneg %p84
        $region30: #{tpu_custom_call.1} parent=27 // pred_check_branch
          %663 = sbr.rel (%p661) target = $region32
        $region31: #{tpu_custom_call.1} parent=27 // pred_region
          %s664 = smul.u32 16, %s19
          %s666 = ssub.s32 1024, 1024
          %667 = vsyncadd %s647, %s666
          %s668 = smul.addr %s664, 64
          %s669 = scalar_lea.hbm %s2, %s668
          %s670 = sshll.u32 %s650, 4
          %s671 = int_to_ptr.vmem [resolvable:$true] %s670
          %676 = dma.vmem_to_hbm [thread:$0]  %s671, 1024, %s669, %s647, 64, 64, 4
        $region32: #{tpu_custom_call.1} parent=27 // pred_fallthru
          _
        // Predicated region
        $region33: #{tpu_custom_call.1} parent=27 // pred_check
          %p677 = pneg %p110
        $region34: #{tpu_custom_call.1} parent=27 // pred_check_branch
          %679 = sbr.rel (%p677) target = $region36
        $region35: #{tpu_custom_call.1} parent=27 // pred_region
          %s680 = smul.u32 16, %s19
        $region36: #{tpu_custom_call.1} parent=27 // pred_fallthru
          _
        // Predicated region
        $region37: #{tpu_custom_call.1} parent=27 // pred_check
          %p681 = pneg %p136
        $region38: #{tpu_custom_call.1} parent=27 // pred_check_branch
          %683 = sbr.rel (%p681) target = $region40
        $region39: #{tpu_custom_call.1} parent=27 // pred_region
          %s684 = smul.u32 16, %s19
        $region40: #{tpu_custom_call.1} parent=27 // pred_fallthru
          _
      $region28: #{tpu_custom_call.1} parent=5 // pred_fallthru
        _
      %p685 = scmp.le.s32.totalorder 2, %s14
      // Predicated region
      $region41: #{tpu_custom_call.1} parent=5 // pred_check
        %p686 = pneg %p685
      $region42: #{tpu_custom_call.1} parent=5 // pred_check_branch
        %688 = sbr.rel (%p686) target = $region44
      $region43: #{tpu_custom_call.1} parent=5 // pred_region
        %s689 = ssub.s32 %s14, 2
        // Predicated region
        $region45: #{tpu_custom_call.1} parent=43 // pred_check
          %p690 = pneg %p90
        $region46: #{tpu_custom_call.1} parent=43 // pred_check_branch
          %692 = sbr.rel (%p690) target = $region48
        $region47: #{tpu_custom_call.1} parent=43 // pred_region
          %s693 = sand.u32 %s75, 1
          %s694 = scalar_lea.sflag [#allocation3], %s693
          %s695 = sand.u32 %s75, 1
          %s696 = smul.addr %s695, 64
          %s697 = scalar_lea.vmem [#allocation2], %s696
          %698 = dma.done %s694, 1024
        $region48: #{tpu_custom_call.1} parent=43 // pred_fallthru
          _
        // Predicated region
        $region49: #{tpu_custom_call.1} parent=43 // pred_check
          %p699 = pneg %p116
        $region50: #{tpu_custom_call.1} parent=43 // pred_check_branch
          %701 = sbr.rel (%p699) target = $region52
        $region51: #{tpu_custom_call.1} parent=43 // pred_region
          %s702 = smul.u32 16, %s20
          %p703 = scmp.lt.s32.totalorder %s702, 31
          %s704 = scalar_select %p703, %s702, 31
          %s705 = smul.addr %s704, 8
          %s706 = scalar_lea.vmem %s3, %s705
        $region52: #{tpu_custom_call.1} parent=43 // pred_fallthru
          _
        // Predicated region
        $region53: #{tpu_custom_call.1} parent=43 // pred_check
          %p707 = pneg %p142
        $region54: #{tpu_custom_call.1} parent=43 // pred_check_branch
          %709 = sbr.rel (%p707) target = $region56
        $region55: #{tpu_custom_call.1} parent=43 // pred_region
          %s710 = smul.u32 16, %s20
          %p711 = scmp.lt.s32.totalorder %s710, 31
          %s712 = scalar_select %p711, %s710, 31
          %s713 = smul.addr %s712, 8
          %s714 = scalar_lea.vmem %s4, %s713
        $region56: #{tpu_custom_call.1} parent=43 // pred_fallthru
          _
      $region44: #{tpu_custom_call.1} parent=5 // pred_fallthru
        _
    $region6: #{tpu_custom_call.1} parent=1 // loop_footer
      %s18 = sadd.s32 1, %s14
    $region7: #{tpu_custom_call.1} parent=1 // loop_footer_branch
      %13 = sbr.rel target = $region3
    $region8: #{tpu_custom_call.1} parent=1 // loop_exit
      _
    %715 = vsyncpa [#allocation3], 1
    %s716 = scalar_lea.sflag [#allocation3], 1
    %717 = vsyncpa %s716, 1

</llo_original>
